<compile_context>
chip_gen: v5e
topology: v5e:2x2
jax: 0.10.0
libtpu: 0.0.40
codegen_flags: <defaults>
</compile_context>

<pallas_src>
import functools

import jax
import jax.numpy as jnp
from jax.experimental import pallas as pl
from jax.experimental.pallas import tpu as pltpu


def _round_up(x, m):
    return ((x + m - 1) // m) * m


# ---------------------------------------------------------------------------
# Kernel: one batch tile -> out = [actor_logits | value | 0-pad]  (128 lanes)
# ---------------------------------------------------------------------------
def _ppo_fused_kernel(x_ref, w1_ref, b1_ref, w2_ref, b2_ref, out_ref):
    # x arrives untouched from the caller (f32); cast to bf16 on the VPU here
    # instead of paying an extra full HBM read+write for a pad/cast pass.
    x = x_ref[...].astype(w1_ref.dtype)                             # [TB, OBS] bf16

    # Fused actor+critic layer 1: one MXU push, one tanh over [TB, 2H] in f32.
    h = jnp.dot(x, w1_ref[...], preferred_element_type=jnp.float32) + b1_ref[...]
    h = jnp.tanh(h).astype(w2_ref.dtype)                            # [TB, 2H] bf16

    # Fused layer 2 (block-diag actor/critic weights) + single lane-dense store.
    out = jnp.dot(h, w2_ref[...], preferred_element_type=jnp.float32) + b2_ref[...]
    # bf16 writeback halves the dominant HBM store stream.
    # TODO(synk): if critic precision matters for GAE, emit the value column as
    # a separate small f32 output instead of sharing this bf16 slab.
    out_ref[...] = out.astype(out_ref.dtype)


# ---------------------------------------------------------------------------
# Parameter packing -- call ONCE per parameter update, NOT per forward call.
# ---------------------------------------------------------------------------
def pack_params(params, *, compute_dtype=jnp.bfloat16):
    """Pack actor+critic params into fused, MXU-friendly buffers.

    Returns (packed_dict, act_dim). Re-pack only when the parameters change
    (once per optimizer step); the packing is a chain of XLA concats/scatters
    that would otherwise dominate this tiny kernel if done per rollout step.
    """
    hidden = params["aw1"].shape[1]
    act_dim = params["aw2"].shape[1]
    h2 = 2 * hidden
    out_cols = _round_up(act_dim + 1, 128)            # lane-dense output width

    # layer 1: [w_a | w_c] -> [OBS, 2H]; bias kept as its own [1, 2H] operand
    w1 = jnp.concatenate([params["aw1"], params["cw1"]], axis=1).astype(compute_dtype)
    b1 = jnp.concatenate([params["ab1"], params["cb1"]], axis=1).astype(jnp.float32)

    # layer 2: block-diag(aw2, cw2), zero-padded to 128 lanes -> [2H, 128]
    w2 = jnp.zeros((h2, out_cols), jnp.float32)
    w2 = w2.at[:hidden, :act_dim].set(params["aw2"])
    w2 = w2.at[hidden:, act_dim:act_dim + 1].set(params["cw2"])
    b2 = jnp.zeros((1, out_cols), jnp.float32)
    b2 = b2.at[0, :act_dim].set(params["ab2"][0])
    b2 = b2.at[0, act_dim].set(params["cb2"][0, 0])

    packed = dict(w1=w1, b1=b1, w2=w2.astype(compute_dtype), b2=b2)
    return packed, act_dim


def _choose_batch_tile(batch, tile_b):
    """Multiple-of-16 batch tile; guarantee >=2 grid tiles when batch allows
    (so v7x's two TensorCores both get work on the 'parallel' axis)."""
    tb = max(16, _round_up(min(tile_b, batch), 16))
    if batch > 16:
        tb = min(tb, max(16, _round_up(pl.cdiv(batch, 2), 16)))
    return tb


# ---------------------------------------------------------------------------
# Forward wrapper
# ---------------------------------------------------------------------------
def ppo_forward(x, packed, *, act_dim, tile_b=2048):
    """Actor & critic forward in one Pallas call.

    Returns (logits [B, act_dim] f32, value [B, 1] f32).
    """
    B, obs_dim = x.shape
    w1, b1, w2, b2 = packed["w1"], packed["b1"], packed["w2"], packed["b2"]
    h2 = w1.shape[1]
    out_cols = w2.shape[1]

    tb = _choose_batch_tile(B, tile_b)
    # Ragged last tile is handled by the grid: OOB input reads are padded
    # (garbage rows stay row-local), OOB output writes are dropped.
    grid = (pl.cdiv(B, tb),)

    cost = pl.CostEstimate(
        flops=2 * B * (obs_dim * h2 + h2 * out_cols),
        transcendentals=B * h2,
        bytes_accessed=(x.size * x.dtype.itemsize            # x read (f32)
                        + B * out_cols * 2                   # bf16 writeback
                        + w1.size * 2 + w2.size * 2          # bf16 weights
                        + (b1.size + b2.size) * 4),          # f32 biases
    )

    out = pl.pallas_call(
        _ppo_fused_kernel,
        out_shape=jax.ShapeDtypeStruct((B, out_cols), jnp.bfloat16),
        grid=grid,
        in_specs=[
            pl.BlockSpec((tb, obs_dim), lambda i: (i, 0)),    # x: tiled over batch
            pl.BlockSpec(w1.shape, lambda i: (0, 0)),         # params stay VMEM-resident
            pl.BlockSpec(b1.shape, lambda i: (0, 0)),
            pl.BlockSpec(w2.shape, lambda i: (0, 0)),
            pl.BlockSpec(b2.shape, lambda i: (0, 0)),
        ],
        out_specs=pl.BlockSpec((tb, out_cols), lambda i: (i, 0)),
        compiler_params=pltpu.CompilerParams(
            dimension_semantics=("parallel",)),
        cost_estimate=cost,
    )(x, w1, b1, w2, b2)

    logits = out[:, :act_dim].astype(jnp.float32)
    value = out[:, act_dim:act_dim + 1].astype(jnp.float32)
    return logits, value


# ---------------------------------------------------------------------------
# Demo / correctness harness
# ---------------------------------------------------------------------------
def init_params(key, obs_dim, hidden, act_dim):
    """Deterministic PyTorch-Linear-style init: U(-1/sqrt(fan_in), 1/sqrt(fan_in))."""
    ks = jax.random.split(key, 8)

    def lin(kw, kb, fan_in, fan_out):
        bound = 1.0 / jnp.sqrt(jnp.float32(fan_in))
        w = jax.random.uniform(kw, (fan_in, fan_out), jnp.float32, -bound, bound)
        b = jax.random.uniform(kb, (1, fan_out), jnp.float32, -bound, bound)
        return w, b

    aw1, ab1 = lin(ks[0], ks[1], obs_dim, hidden)
    aw2, ab2 = lin(ks[2], ks[3], hidden, act_dim)
    cw1, cb1 = lin(ks[4], ks[5], obs_dim, hidden)
    cw2, cb2 = lin(ks[6], ks[7], hidden, 1)
    return dict(aw1=aw1, ab1=ab1, aw2=aw2, ab2=ab2,
                cw1=cw1, cb1=cb1, cw2=cw2, cb2=cb2)


def reference_forward(x, p):
    h_a = jnp.tanh(x @ p["aw1"] + p["ab1"])
    logits = h_a @ p["aw2"] + p["ab2"]
    h_c = jnp.tanh(x @ p["cw1"] + p["cb1"])
    value = h_c @ p["cw2"] + p["cb2"]
    return logits, value


if __name__ == "__main__":
    # Small shapes consistent with a PPO actor-critic on a vector observation.
    # B=50 (not tile-aligned) exercises the ragged last batch tile and yields a
    # 2-tile "parallel" grid (both v7x TensorCores active).
    B, OBS, HIDDEN, ACT = 50, 32, 32, 8

    key = jax.random.PRNGKey(0)
    k_x, k_p = jax.random.split(key)
    x = jax.random.normal(k_x, (B, OBS), jnp.float32)
    params = init_params(k_p, OBS, HIDDEN, ACT)

    # Pack once (per optimizer step in a real PPO loop), then reuse every call.
    packed, act_dim = pack_params(params)

    fwd = jax.jit(functools.partial(ppo_forward, act_dim=act_dim))
    logits, value = fwd(x, packed)
    jax.block_until_ready((logits, value))

    ref_logits, ref_value = reference_forward(x, params)
    assert logits.shape == (B, ACT) and value.shape == (B, 1)
    # bf16 MXU operands + bf16 writeback -> looser tolerance vs f32 reference.
    assert jnp.allclose(logits, ref_logits, atol=5e-2, rtol=5e-2)
    assert jnp.allclose(value, ref_value, atol=5e-2, rtol=5e-2)

    print("KERNEL_OK")
</pallas_src>

<mosaic_0001>
module attributes {stable_mosaic.version = 11 : i64} {
  func.func @_ppo_fused_kernel(%arg0: i32, %arg1: memref<32x32xf32, #tpu.memory_space<vmem>>, %arg2: memref<32x64xbf16, #tpu.memory_space<vmem>>, %arg3: memref<1x64xf32, #tpu.memory_space<vmem>>, %arg4: memref<64x128xbf16, #tpu.memory_space<vmem>>, %arg5: memref<1x128xf32, #tpu.memory_space<vmem>>, %arg6: memref<32x128xbf16, #tpu.memory_space<vmem>>) attributes {dimension_semantics = [#tpu.dimension_semantics<parallel>], iteration_bounds = array<i64: 2>, scalar_prefetch = 0 : i64, scratch_operands = 0 : i64, tpu.core_type = #tpu.core_type<tc>, window_params = [{transform_indices = @transform_0, window_bounds = array<i64: 32, 32>}, {pipeline_mode = #tpu.pipeline_mode<synchronous>, transform_indices = @transform_1, window_bounds = array<i64: 32, 64>}, {pipeline_mode = #tpu.pipeline_mode<synchronous>, transform_indices = @transform_2, window_bounds = array<i64: 1, 64>}, {pipeline_mode = #tpu.pipeline_mode<synchronous>, transform_indices = @transform_3, window_bounds = array<i64: 64, 128>}, {pipeline_mode = #tpu.pipeline_mode<synchronous>, transform_indices = @transform_4, window_bounds = array<i64: 1, 128>}, {transform_indices = @transform_5, window_bounds = array<i64: 32, 128>}]} {
    %c0 = arith.constant 0 : index
    %c0_0 = arith.constant 0 : index
    %0 = vector.load %arg1[%c0, %c0_0] : memref<32x32xf32, #tpu.memory_space<vmem>>, vector<32x32xf32>
    %1 = arith.truncf %0 : vector<32x32xf32> to vector<32x32xbf16>
    %c0_1 = arith.constant 0 : index
    %c0_2 = arith.constant 0 : index
    %2 = vector.load %arg2[%c0_1, %c0_2] : memref<32x64xbf16, #tpu.memory_space<vmem>>, vector<32x64xbf16>
    %cst = arith.constant dense<0.000000e+00> : vector<32x64xf32>
    %3 = tpu.matmul %1, %2, %cst {dimension_numbers = #tpu.dot_dimension_numbers<[1], [0], [0], [1], [0, 0, 1, 1], [], []>} : vector<32x32xbf16>, vector<32x64xbf16>, vector<32x64xf32> -> vector<32x64xf32>
    %c0_3 = arith.constant 0 : index
    %c0_4 = arith.constant 0 : index
    %4 = vector.load %arg3[%c0_3, %c0_4] : memref<1x64xf32, #tpu.memory_space<vmem>>, vector<1x64xf32>
    %5 = vector.broadcast %4 : vector<1x64xf32> to vector<32x64xf32>
    %6 = arith.addf %3, %5 : vector<32x64xf32>
    %7 = math.tanh %6 : vector<32x64xf32>
    %8 = arith.truncf %7 : vector<32x64xf32> to vector<32x64xbf16>
    %c0_5 = arith.constant 0 : index
    %c0_6 = arith.constant 0 : index
    %9 = vector.load %arg4[%c0_5, %c0_6] : memref<64x128xbf16, #tpu.memory_space<vmem>>, vector<64x128xbf16>
    %cst_7 = arith.constant dense<0.000000e+00> : vector<32x128xf32>
    %10 = tpu.matmul %8, %9, %cst_7 {dimension_numbers = #tpu.dot_dimension_numbers<[1], [0], [0], [1], [0, 0, 1, 1], [], []>} : vector<32x64xbf16>, vector<64x128xbf16>, vector<32x128xf32> -> vector<32x128xf32>
    %c0_8 = arith.constant 0 : index
    %c0_9 = arith.constant 0 : index
    %11 = vector.load %arg5[%c0_8, %c0_9] : memref<1x128xf32, #tpu.memory_space<vmem>>, vector<1x128xf32>
    %12 = vector.broadcast %11 : vector<1x128xf32> to vector<32x128xf32>
    %13 = arith.addf %10, %12 : vector<32x128xf32>
    %14 = arith.truncf %13 : vector<32x128xf32> to vector<32x128xbf16>
    %c0_10 = arith.constant 0 : index
    %c0_11 = arith.constant 0 : index
    %15 = vector.load %arg6[%c0_10, %c0_11] : memref<32x128xbf16, #tpu.memory_space<vmem>>, vector<32x128xbf16>
    tpu.vector_store %arg6[%c0_10, %c0_11], %14 {strides = array<i32>} : memref<32x128xbf16, #tpu.memory_space<vmem>>, vector<32x128xbf16>,
    return
  }
  func.func @transform_0(%arg0: i32) -> (i32, i32) {
    %c0_i32 = arith.constant 0 : i32
    %c0_i32_0 = arith.constant 0 : i32
    return %arg0, %c0_i32 : i32, i32
  }
  func.func @transform_1(%arg0: i32) -> (i32, i32) {
    %c0_i32 = arith.constant 0 : i32
    %c0_i32_0 = arith.constant 0 : i32
    %c0_i32_1 = arith.constant 0 : i32
    return %c0_i32, %c0_i32_0 : i32, i32
  }
  func.func @transform_2(%arg0: i32) -> (i32, i32) {
    %c0_i32 = arith.constant 0 : i32
    %c0_i32_0 = arith.constant 0 : i32
    %c0_i32_1 = arith.constant 0 : i32
    return %c0_i32, %c0_i32_0 : i32, i32
  }
  func.func @transform_3(%arg0: i32) -> (i32, i32) {
    %c0_i32 = arith.constant 0 : i32
    %c0_i32_0 = arith.constant 0 : i32
    %c0_i32_1 = arith.constant 0 : i32
    return %c0_i32, %c0_i32_0 : i32, i32
  }
  func.func @transform_4(%arg0: i32) -> (i32, i32) {
    %c0_i32 = arith.constant 0 : i32
    %c0_i32_0 = arith.constant 0 : i32
    %c0_i32_1 = arith.constant 0 : i32
    return %c0_i32, %c0_i32_0 : i32, i32
  }
  func.func @transform_5(%arg0: i32) -> (i32, i32) {
    %c0_i32 = arith.constant 0 : i32
    %c0_i32_0 = arith.constant 0 : i32
    return %arg0, %c0_i32 : i32, i32
  }
}

</mosaic_0001>

<llo_original>
// kernel: ppo_forward.1
$region0: #{ppo_forward.1}
  #allocation0 [shape = 'u32[]', space=smem, size = 0x4, offset = 0x4, fixed_abs, tag = 'smem constant byte address 0x4 - core index']
  #allocation1 [shape = 'u32[72,128]{1,0:T(1,128)}', space=vmem, size = 0x9000, scoped, tag = 'internal scratch']
  %s0 = inlined_call_operand.vmem [shape: f32[50,32], index: 0, kind: input, shape index: {}]
  %s1 = inlined_call_operand.vmem [shape: bf16[32,64], index: 1, kind: input, shape index: {}]
  %s2 = inlined_call_operand.vmem [shape: f32[1,64], index: 2, kind: input, shape index: {}]
  %s3 = inlined_call_operand.vmem [shape: bf16[64,128], index: 3, kind: input, shape index: {}]
  %s4 = inlined_call_operand.vmem [shape: f32[1,128], index: 4, kind: input, shape index: {}]
  %s5 = inlined_call_operand.vmem [shape: bf16[50,128], index: 5, kind: output, shape index: {}]
  %s6 = sld [smem:[#allocation0]]
  $region97: #{ppo_forward.1} parent=0
    _
  %s8 = ssub.s32 1, %s6
  %s9 = scalar_select 0, %s8, %s6
  $region1: #{ppo_forward.1} parent=0
    #allocation2 [shape = 'u8[16384]{0}', space=vmem, size = 0x4000, scoped, tag = 'output window, operand 0']
    loop: start=0, step=1, limit=4
    $region2: #{ppo_forward.1} parent=1 // loop_pre_header
      _
    $region3: #{ppo_forward.1} parent=1 // loop_header
      %s11 = sphi 0, %s15
      %p12 = scmp.ge.s32.totalorder %s11, 4
      %s21 = sphi 0, %s23
      %s24 = sphi 0, %s21
      %s25 = sphi 0, %s24
      %s41 = sphi 0, %s25
      %s45 = sphi 0, %s45
      %s47 = sphi 0, %s45
      %s48 = sphi 0, %s47
      %s62 = sphi 0, %s48
      %s66 = sphi 0, %s66
      %s68 = sphi 0, %s66
      %s69 = sphi 0, %s68
      %s83 = sphi 0, %s69
      %s87 = sphi 0, %s87
      %s89 = sphi 0, %s87
      %s90 = sphi 0, %s89
      %s104 = sphi 0, %s90
      %s108 = sphi 0, %s108
      %s110 = sphi 0, %s108
      %s111 = sphi 0, %s110
      %s125 = sphi 0, %s111
      %s131 = sphi 0, %s133
      %s134 = sphi 0, %s131
      %s135 = sphi 0, %s134
      %s151 = sphi 0, %s135
    $region4: #{ppo_forward.1} parent=1 // loop_header_branch
      %14 = sbr.rel (%p12) target = $region8
    $region5: #{ppo_forward.1} parent=1 // loop_body
      %s16 = ssub.s32 %s11, 1
      %s17 = ssub.s32 %s11, 2
      %s18 = sadd.s32 %s11, 1
      %s19 = ssub.s32 %s11, %s18
      %p20 = scmp.eq.s32.totalorder %s19, 0
      %s22 = sadd.s32 %s21, 1
      %s23 = scalar_select %p20, %s21, %s22
      %p26 = pneg %p20
      %p27 = scmp.eq.s32.totalorder %s11, 1
      %p28 = por %p26, %p27
      %p29 = scmp.ne.s32.totalorder %s21, %s24
      %p30 = scmp.eq.s32.totalorder %s11, 0
      %p31 = por %p29, %p30
      %p32 = scmp.ne.s32.totalorder %s21, %s24
      %p33 = scmp.eq.s32.totalorder %s16, 1
      %p34 = por %p32, %p33
      %p35 = scmp.ne.s32.totalorder %s24, %s25
      %p36 = scmp.eq.s32.totalorder %s16, 0
      %p37 = por %p35, %p36
      %p38 = scmp.ne.s32.totalorder %s24, %s25
      %p39 = scmp.eq.s32.totalorder %s17, 1
      %p40 = por %p38, %p39
      %p42 = scmp.ne.s32.totalorder %s25, %s41
      %p43 = scmp.eq.s32.totalorder %s17, 0
      %p44 = por %p42, %p43
      %s46 = sadd.s32 %s45, 1
      %p49 = scmp.eq.s32.totalorder %s11, 1
      %p50 = scmp.ne.s32.totalorder %s45, %s47
      %p51 = scmp.eq.s32.totalorder %s11, 0
      %p52 = por %p50, %p51
      %p53 = scmp.ne.s32.totalorder %s45, %s47
      %p54 = scmp.eq.s32.totalorder %s16, 1
      %p55 = por %p53, %p54
      %p56 = scmp.ne.s32.totalorder %s47, %s48
      %p57 = scmp.eq.s32.totalorder %s16, 0
      %p58 = por %p56, %p57
      %p59 = scmp.ne.s32.totalorder %s47, %s48
      %p60 = scmp.eq.s32.totalorder %s17, 1
      %p61 = por %p59, %p60
      %p63 = scmp.ne.s32.totalorder %s48, %s62
      %p64 = scmp.eq.s32.totalorder %s17, 0
      %p65 = por %p63, %p64
      %s67 = sadd.s32 %s66, 1
      %p70 = scmp.eq.s32.totalorder %s11, 1
      %p71 = scmp.ne.s32.totalorder %s66, %s68
      %p72 = scmp.eq.s32.totalorder %s11, 0
      %p73 = por %p71, %p72
      %p74 = scmp.ne.s32.totalorder %s66, %s68
      %p75 = scmp.eq.s32.totalorder %s16, 1
      %p76 = por %p74, %p75
      %p77 = scmp.ne.s32.totalorder %s68, %s69
      %p78 = scmp.eq.s32.totalorder %s16, 0
      %p79 = por %p77, %p78
      %p80 = scmp.ne.s32.totalorder %s68, %s69
      %p81 = scmp.eq.s32.totalorder %s17, 1
      %p82 = por %p80, %p81
      %p84 = scmp.ne.s32.totalorder %s69, %s83
      %p85 = scmp.eq.s32.totalorder %s17, 0
      %p86 = por %p84, %p85
      %s88 = sadd.s32 %s87, 1
      %p91 = scmp.eq.s32.totalorder %s11, 1
      %p92 = scmp.ne.s32.totalorder %s87, %s89
      %p93 = scmp.eq.s32.totalorder %s11, 0
      %p94 = por %p92, %p93
      %p95 = scmp.ne.s32.totalorder %s87, %s89
      %p96 = scmp.eq.s32.totalorder %s16, 1
      %p97 = por %p95, %p96
      %p98 = scmp.ne.s32.totalorder %s89, %s90
      %p99 = scmp.eq.s32.totalorder %s16, 0
      %p100 = por %p98, %p99
      %p101 = scmp.ne.s32.totalorder %s89, %s90
      %p102 = scmp.eq.s32.totalorder %s17, 1
      %p103 = por %p101, %p102
      %p105 = scmp.ne.s32.totalorder %s90, %s104
      %p106 = scmp.eq.s32.totalorder %s17, 0
      %p107 = por %p105, %p106
      %s109 = sadd.s32 %s108, 1
      %p112 = scmp.eq.s32.totalorder %s11, 1
      %p113 = scmp.ne.s32.totalorder %s108, %s110
      %p114 = scmp.eq.s32.totalorder %s11, 0
      %p115 = por %p113, %p114
      %p116 = scmp.ne.s32.totalorder %s108, %s110
      %p117 = scmp.eq.s32.totalorder %s16, 1
      %p118 = por %p116, %p117
      %p119 = scmp.ne.s32.totalorder %s110, %s111
      %p120 = scmp.eq.s32.totalorder %s16, 0
      %p121 = por %p119, %p120
      %p122 = scmp.ne.s32.totalorder %s110, %s111
      %p123 = scmp.eq.s32.totalorder %s17, 1
      %p124 = por %p122, %p123
      %p126 = scmp.ne.s32.totalorder %s111, %s125
      %p127 = scmp.eq.s32.totalorder %s17, 0
      %p128 = por %p126, %p127
      %s129 = ssub.s32 %s11, %s18
      %p130 = scmp.eq.s32.totalorder %s129, 0
      %s132 = sadd.s32 %s131, 1
      %s133 = scalar_select %p130, %s131, %s132
      %p136 = pneg %p130
      %p137 = scmp.eq.s32.totalorder %s11, 1
      %p138 = por %p136, %p137
      %p139 = scmp.ne.s32.totalorder %s131, %s134
      %p140 = scmp.eq.s32.totalorder %s11, 0
      %p141 = por %p139, %p140
      %p142 = scmp.ne.s32.totalorder %s131, %s134
      %p143 = scmp.eq.s32.totalorder %s16, 1
      %p144 = por %p142, %p143
      %p145 = scmp.ne.s32.totalorder %s134, %s135
      %p146 = scmp.eq.s32.totalorder %s16, 0
      %p147 = por %p145, %p146
      %p148 = scmp.ne.s32.totalorder %s134, %s135
      %p149 = scmp.eq.s32.totalorder %s17, 1
      %p150 = por %p148, %p149
      %p152 = scmp.ne.s32.totalorder %s135, %s151
      %p153 = scmp.eq.s32.totalorder %s17, 0
      %p154 = por %p152, %p153
      %p155 = scmp.le.s32.totalorder 1, %s11
      %p156 = scmp.lt.s32.totalorder %s11, 3
      %p157 = pnand %p155, %p156
      %p158 = pneg %p157
      // Predicated region
      $region9: #{ppo_forward.1} parent=5 // pred_check
        _
      $region10: #{ppo_forward.1} parent=5 // pred_check_branch
        %160 = sbr.rel (%p157) target = $region12
      $region11: #{ppo_forward.1} parent=5 // pred_region
        %s161 = ssub.s32 %s11, 1
        // Predicated region
        $region13: #{ppo_forward.1} parent=11 // pred_check
          %p162 = pneg %p58
        $region14: #{ppo_forward.1} parent=11 // pred_check_branch
          %164 = sbr.rel (%p162) target = $region16
        $region15: #{ppo_forward.1} parent=11 // pred_region
          _
        $region16: #{ppo_forward.1} parent=11 // pred_fallthru
          _
        // Predicated region
        $region17: #{ppo_forward.1} parent=11 // pred_check
          %p165 = pneg %p79
        $region18: #{ppo_forward.1} parent=11 // pred_check_branch
          %167 = sbr.rel (%p165) target = $region20
        $region19: #{ppo_forward.1} parent=11 // pred_region
          _
        $region20: #{ppo_forward.1} parent=11 // pred_fallthru
          _
        // Predicated region
        $region21: #{ppo_forward.1} parent=11 // pred_check
          %p168 = pneg %p100
        $region22: #{ppo_forward.1} parent=11 // pred_check_branch
          %170 = sbr.rel (%p168) target = $region24
        $region23: #{ppo_forward.1} parent=11 // pred_region
          _
        $region24: #{ppo_forward.1} parent=11 // pred_fallthru
          _
        // Predicated region
        $region25: #{ppo_forward.1} parent=11 // pred_check
          %p171 = pneg %p121
        $region26: #{ppo_forward.1} parent=11 // pred_check_branch
          %173 = sbr.rel (%p171) target = $region28
        $region27: #{ppo_forward.1} parent=11 // pred_region
          _
        $region28: #{ppo_forward.1} parent=11 // pred_fallthru
          _
      $region12: #{ppo_forward.1} parent=5 // pred_fallthru
        _
      %p174 = scmp.lt.s32.totalorder %s11, 2
      // Predicated region
      $region29: #{ppo_forward.1} parent=5 // pred_check
        %p175 = pneg %p174
      $region30: #{ppo_forward.1} parent=5 // pred_check_branch
        %177 = sbr.rel (%p175) target = $region32
      $region31: #{ppo_forward.1} parent=5 // pred_region
        // Predicated region
        $region33: #{ppo_forward.1} parent=31 // pred_check
          %p178 = pneg %p31
        $region34: #{ppo_forward.1} parent=31 // pred_check_branch
          %180 = sbr.rel (%p178) target = $region36
        $region35: #{ppo_forward.1} parent=31 // pred_region
          %s181 = smul.u32 4, %s11
          %s182 = ssub.s32 7, %s181
          %p183 = scmp.lt.s32.totalorder %s182, 4
          %s184 = scalar_select %p183, %s182, 4
          %s185 = smul.u32 8, %s184
          %p186 = scmp.lt.s32.totalorder %s181, 6
          %s187 = scalar_select %p186, %s181, 6
          %s188 = smul.addr %s187, 8
          %s189 = scalar_lea.vmem %s0, %s188
          %s190 = smul.u32 4, %s11
          %s191 = ssub.s32 7, %s190
          %p192 = scmp.lt.s32.totalorder %s191, 4
          %s193 = scalar_select %p192, %s191, 4
          %s194 = smul.u32 8, %s193
        $region36: #{ppo_forward.1} parent=31 // pred_fallthru
          _
      $region32: #{ppo_forward.1} parent=5 // pred_fallthru
        _
      %p195 = scmp.le.s32.totalorder 1, %s11
      %p196 = scmp.lt.s32.totalorder %s11, 3
      %p197 = pnand %p195, %p196
      %p198 = pneg %p197
      // Predicated region
      $region37: #{ppo_forward.1} parent=5 // pred_check
        _
      $region38: #{ppo_forward.1} parent=5 // pred_check_branch
        %200 = sbr.rel (%p197) target = $region40
      $region39: #{ppo_forward.1} parent=5 // pred_region
        %s201 = ssub.s32 %s11, 1
        %s202 = smul.u32 4, %s16
        %s203 = ssub.s32 7, %s202
        %p204 = scmp.lt.s32.totalorder %s203, 4
        %s205 = scalar_select %p204, %s203, 4
        %s206 = smul.u32 8, %s205
        %p207 = scmp.lt.s32.totalorder %s202, 6
        %s208 = scalar_select %p207, %s202, 6
        %s209 = smul.addr %s208, 8
        %s210 = scalar_lea.vmem %s0, %s209
        %p211 = pneg %p37
        %p212 = pneg %p34
        %p213 = pneg %p58
        %p214 = pneg %p55
        %p215 = pneg %p79
        %p216 = pneg %p76
        %p217 = pneg %p100
        %p218 = pneg %p97
        %p219 = pneg %p121
        %p220 = pneg %p118
        %p221 = pneg %p147
        %p222 = pneg %p144
        %s223 = sand.u32 %s134, 1
        %s224 = sand.u32 %s134, 1
        %s225 = smul.addr %s224, 16
        %s226 = scalar_lea.vmem [#allocation2], %s225
        %s227 = smul.u32 4, %s16
        %s228 = ssub.s32 7, %s227
        %p229 = scmp.lt.s32.totalorder %s228, 4
        %s230 = scalar_select %p229, %s228, 4
        %s231 = smul.u32 8, %s230
        %p232 = scmp.lt.s32.totalorder %s227, 6
        %s233 = scalar_select %p232, %s227, 6
        %s234 = smul.addr %s233, 8
        %s235 = scalar_lea.vmem %s0, %s234
        %s236 = smul.u32 4, %s16
        %s237 = ssub.s32 7, %s236
        %p238 = scmp.lt.s32.totalorder %s237, 4
        %s239 = scalar_select %p238, %s237, 4
        %s240 = smul.u32 8, %s239
        %s241 = smul.u32 4, %s16
        %s242 = ssub.s32 7, %s241
        %p243 = scmp.lt.s32.totalorder %s242, 4
        %s244 = scalar_select %p243, %s242, 4
        %s245 = smul.u32 4, %s244
        %v247 = vld [vmem:[%s235] sm:$0xff]
        %v248 = vld [vmem:[%s235 + $0x8] sm:$0xff]
        %v249 = vld [vmem:[%s235 + $0x10] sm:$0xff]
        %v250 = vld [vmem:[%s235 + $0x18] sm:$0xff]
        %v251 = vpack.c.bf16 %v248, %v247
        %v252 = vpack.c.bf16 %v250, %v249
        %v253 = vld [vmem:[%s1] sm:$0xf]
        %v254 = vld [vmem:[%s1 + $0x4] sm:$0xf]
        %v255 = vld [vmem:[%s1 + $0x8] sm:$0xf]
        %v256 = vld [vmem:[%s1 + $0xc] sm:$0xf]
        %v257 = vld [vmem:[%s2] sm:$0x1]
        %v259 = vperm.slane %v257, 0
        %v265 = vunpack.c.l.b16 %v253
        %v266 = vunpack.c.l.b16 %v254
        %v267 = vunpack.c.l.b16 %v255
        %v268 = vunpack.c.l.b16 %v256
        %v269 = vpack.c.b16 %v266, %v265
        %v270 = vpack.c.b16 %v268, %v267
        %vm273 = vcmask 261120
        %v275 = vsel %vm273, %v251, 0
        %v278 = vsel %vm273, %v252, 0
        %280 = vmatpush.bf16.msra.mxu0 0
        %281 = vmatpush.bf16.msra.mxu0 0
        %282 = vmatpush.bf16.msra.mxu0 0
        %283 = vmatpush.bf16.msra.mxu0 0
        %284 = vmatpush.bf16.msra.mxu0 0
        %285 = vmatpush.bf16.msra.mxu0 0
        %286 = vmatpush.bf16.msra.mxu0 %v270
        %287 = vmatpush.bf16.msra.mxu0 %v269
        %288 = vmatmul.bf16.gmra.mxu0 %v275
        %v289 = vpop.f32.mrf.mxu0
        %v290 = vadd.f32 %v259, %v289
        %v291 = vpop.f32.mrf.mxu0
        %v292 = vadd.f32 %v259, %v291
        %293 = vmatmul.bf16.gmra.mxu0 %v278
        %v294 = vpop.f32.mrf.mxu0
        %v295 = vadd.f32 %v259, %v294
        %v296 = vpop.f32.mrf.mxu0
        %v297 = vadd.f32 %v259, %v296
        %298 = vdwg.mxu0
        %v299 = vtanh.pop %v290
        %v300 = vtanh.pop %v292
        %v301 = vtanh.pop %v295
        %v302 = vtanh.pop %v297
        %v303 = vpack.c.bf16 %v300, %v299
        %v304 = vpack.c.bf16 %v302, %v301
        %v305 = vld [vmem:[%s3] sm:$0xf]
        %v306 = vld [vmem:[%s3 + $0x4] sm:$0xf]
        %v307 = vld [vmem:[%s3 + $0x8] sm:$0xf]
        %v308 = vld [vmem:[%s3 + $0xc] sm:$0xf]
        %v309 = vld [vmem:[%s3 + $0x10] sm:$0xf]
        %v310 = vld [vmem:[%s3 + $0x14] sm:$0xf]
        %v311 = vld [vmem:[%s3 + $0x18] sm:$0xf]
        %v312 = vld [vmem:[%s3 + $0x1c] sm:$0xf]
        %v313 = vld [vmem:[%s4] sm:$0x1]
        %v315 = vperm.slane %v313, 0
        %v325 = vunpack.c.l.b16 %v305
        %v326 = vunpack.c.l.b16 %v306
        %v327 = vunpack.c.l.b16 %v307
        %v328 = vunpack.c.l.b16 %v308
        %v329 = vunpack.c.l.b16 %v309
        %v330 = vunpack.c.l.b16 %v310
        %v331 = vunpack.c.l.b16 %v311
        %v332 = vunpack.c.l.b16 %v312
        %v333 = vpack.c.b16 %v326, %v325
        %v334 = vpack.c.b16 %v328, %v327
        %v335 = vpack.c.b16 %v330, %v329
        %v336 = vpack.c.b16 %v332, %v331
        %vm341 = vcmask 523264
        %v343 = vsel %vm341, %v303, 0
        %v346 = vsel %vm341, %v304, 0
        %348 = vmatpush.bf16.msra.mxu0 0
        %349 = vmatpush.bf16.msra.mxu0 0
        %350 = vmatpush.bf16.msra.mxu0 0
        %351 = vmatpush.bf16.msra.mxu0 0
        %352 = vmatpush.bf16.msra.mxu0 %v336
        %353 = vmatpush.bf16.msra.mxu0 %v335
        %354 = vmatpush.bf16.msra.mxu0 %v334
        %355 = vmatpush.bf16.msra.mxu0 %v333
        %356 = vmatmul.bf16.gmra.mxu0 %v343
        %v357 = vpop.f32.mrf.mxu0
        %v358 = vadd.f32 %v315, %v357
        %v359 = vpop.f32.mrf.mxu0
        %v360 = vadd.f32 %v315, %v359
        %361 = vmatmul.bf16.gmra.mxu0 %v346
        %v362 = vpop.f32.mrf.mxu0
        %v363 = vadd.f32 %v315, %v362
        %v364 = vpop.f32.mrf.mxu0
        %v365 = vadd.f32 %v315, %v364
        %366 = vdwg.mxu0
        %v367 = vpack.c.bf16 %v358, %v358
        %v368 = vpack.c.bf16 %v360, %v360
        %v369 = vpack.c.bf16 %v363, %v363
        %v370 = vpack.c.bf16 %v365, %v365
        %371 = vst [vmem:[%s226] sm:$0xf] %v367
        %372 = vst [vmem:[%s226 + $0x4] sm:$0xf] %v368
        %373 = vst [vmem:[%s226 + $0x8] sm:$0xf] %v369
        %374 = vst [vmem:[%s226 + $0xc] sm:$0xf] %v370
        %s375 = sand.u32 %s134, 1
        %s376 = sand.u32 %s134, 1
        %s377 = smul.addr %s376, 16
        %s378 = scalar_lea.vmem [#allocation2], %s377
        // Predicated region
        $region41: #{ppo_forward.1} parent=39 // pred_check
          %p379 = pneg %p144
        $region42: #{ppo_forward.1} parent=39 // pred_check_branch
          %381 = sbr.rel (%p379) target = $region44
        $region43: #{ppo_forward.1} parent=39 // pred_region
          %s382 = smul.u32 4, %s16
          %s383 = ssub.s32 7, %s382
          %p384 = scmp.lt.s32.totalorder %s383, 4
          %s385 = scalar_select %p384, %s383, 4
          %s386 = smul.u32 4, %s385
          %p387 = scmp.ne.s32.totalorder 0, %s386
          %s388 = smul.addr %s382, 4
          %s389 = scalar_lea.vmem %s5, %s388
          // Predicated region
          $region45: #{ppo_forward.1} parent=43 // pred_check
            %p390 = pneg %p387
          $region46: #{ppo_forward.1} parent=43 // pred_check_branch
            %392 = sbr.rel (%p390) target = $region48
          $region47: #{ppo_forward.1} parent=43 // pred_region
            // Predicated region
            $region49: #{ppo_forward.1} parent=47 // pred_check
              _
            $region50: #{ppo_forward.1} parent=47 // pred_check_branch
              %394 = sbr.rel target = $region52
            $region51: #{ppo_forward.1} parent=47 // pred_region
              // Predicated region
              $region71: #{ppo_forward.1} parent=51 // pred_check
                _
              $region72: #{ppo_forward.1} parent=51 // pred_check_branch
                %450 = sbr.rel (0) target = $region74
              $region73: #{ppo_forward.1} parent=51 // pred_region
                %s452 = ssub.s32 16, 1
                %s453 = sshrl.u32 %s385, 2
                // While loop
                $region75: #{ppo_forward.1} parent=73 // loop_pre_header
                  _
                $region76: #{ppo_forward.1} parent=73 // loop_header
                  %s455 = sphi 0, %s457
                  %p456 = scmp.ge.s32.totalorder %s455, %s453
                  %s460 = sphi 0, %s473
                  %s461 = sphi %s378, %s476
                  %s462 = sphi %s389, %s477
                $region77: #{ppo_forward.1} parent=73 // loop_header_branch
                  %459 = sbr.rel (%p456) target = $region81
                $region78: #{ppo_forward.1} parent=73 // loop_body
                  %v463 = vld [vmem:[%s461] sm:%s452]
                  %464 = vst [vmem:[%s462] sm:%s452] %v463
                  %v465 = vld [vmem:[%s461 + $0x4] sm:%s452]
                  %466 = vst [vmem:[%s462 + $0x4] sm:%s452] %v465
                  %v467 = vld [vmem:[%s461 + $0x8] sm:%s452]
                  %468 = vst [vmem:[%s462 + $0x8] sm:%s452] %v467
                  %v469 = vld [vmem:[%s461 + $0xc] sm:%s452]
                  %470 = vst [vmem:[%s462 + $0xc] sm:%s452] %v469
                  %s471 = sadd.s32 1, %s460
                  %p472 = scmp.ge.s32.totalorder %s471, %s453
                  %s473 = scalar_select %p472, 0, %s471
                  %s474 = smul.u32 %s473, 16
                  %s475 = smul.u32 %s473, 16
                  %s476 = scalar_lea.vmem %s378, %s474 [#allocation2]
                  %s477 = scalar_lea.vmem %s389, %s475
                $region79: #{ppo_forward.1} parent=73 // loop_footer
                  %s457 = sadd.s32 %s455, 1
                $region80: #{ppo_forward.1} parent=73 // loop_footer_branch
                  %454 = sbr.rel target = $region76
                $region81: #{ppo_forward.1} parent=73 // loop_exit
                  _
                %s478 = sshrl.u32 %s385, 2
                %s479 = sand.u32 %s385, 3
                %s480 = smul.u32 %s478, 4
                %s481 = smul.u32 4, %s480
                %s482 = scalar_lea.vmem %s378, %s481 [#allocation2]
                %s483 = smul.u32 4, %s480
                %s484 = scalar_lea.vmem %s389, %s483
                // While loop
                $region82: #{ppo_forward.1} parent=73 // loop_pre_header
                  _
                $region83: #{ppo_forward.1} parent=73 // loop_header
                  %s486 = sphi 0, %s488
                  %p487 = scmp.ge.s32.totalorder %s486, %s479
                  %s491 = sphi 0, %s498
                  %s492 = sphi %s482, %s501
                  %s493 = sphi %s484, %s502
                $region84: #{ppo_forward.1} parent=73 // loop_header_branch
                  %490 = sbr.rel (%p487) target = $region88
                $region85: #{ppo_forward.1} parent=73 // loop_body
                  %v494 = vld [vmem:[%s492] sm:%s452]
                  %495 = vst [vmem:[%s493] sm:%s452] %v494
                  %s496 = sadd.s32 1, %s491
                  %p497 = scmp.ge.s32.totalorder %s496, %s479
                  %s498 = scalar_select %p497, 0, %s496
                  %s499 = smul.u32 %s498, 4
                  %s500 = smul.u32 %s498, 4
                  %s501 = scalar_lea.vmem %s482, %s499 [#allocation2]
                  %s502 = scalar_lea.vmem %s484, %s500
                $region86: #{ppo_forward.1} parent=73 // loop_footer
                  %s488 = sadd.s32 %s486, 1
                $region87: #{ppo_forward.1} parent=73 // loop_footer_branch
                  %485 = sbr.rel target = $region83
                $region88: #{ppo_forward.1} parent=73 // loop_exit
                  _
              $region74: #{ppo_forward.1} parent=51 // pred_fallthru
                _
            $region52: #{ppo_forward.1} parent=47 // pred_fallthru
              _
            // Predicated region
            $region53: #{ppo_forward.1} parent=47 // pred_check
              _
            $region54: #{ppo_forward.1} parent=47 // pred_check_branch
              %396 = sbr.rel (0) target = $region56
            $region55: #{ppo_forward.1} parent=47 // pred_region
              %s398 = ssub.s32 16, 1
              %s399 = sshrl.u32 %s385, 2
              // While loop
              $region57: #{ppo_forward.1} parent=55 // loop_pre_header
                _
              $region58: #{ppo_forward.1} parent=55 // loop_header
                %s401 = sphi 0, %s403
                %p402 = scmp.ge.s32.totalorder %s401, %s399
                %s406 = sphi 0, %s419
                %s407 = sphi %s378, %s422
                %s408 = sphi %s389, %s423
              $region59: #{ppo_forward.1} parent=55 // loop_header_branch
                %405 = sbr.rel (%p402) target = $region63
              $region60: #{ppo_forward.1} parent=55 // loop_body
                %v409 = vld [vmem:[%s407] sm:%s398]
                %410 = vst [vmem:[%s408] sm:%s398] %v409
                %v411 = vld [vmem:[%s407 + $0x4] sm:%s398]
                %412 = vst [vmem:[%s408 + $0x4] sm:%s398] %v411
                %v413 = vld [vmem:[%s407 + $0x8] sm:%s398]
                %414 = vst [vmem:[%s408 + $0x8] sm:%s398] %v413
                %v415 = vld [vmem:[%s407 + $0xc] sm:%s398]
                %416 = vst [vmem:[%s408 + $0xc] sm:%s398] %v415
                %s417 = sadd.s32 1, %s406
                %p418 = scmp.ge.s32.totalorder %s417, %s399
                %s419 = scalar_select %p418, 0, %s417
                %s420 = smul.u32 %s419, 16
                %s421 = smul.u32 %s419, 16
                %s422 = scalar_lea.vmem %s378, %s420 [#allocation2]
                %s423 = scalar_lea.vmem %s389, %s421
              $region61: #{ppo_forward.1} parent=55 // loop_footer
                %s403 = sadd.s32 %s401, 1
              $region62: #{ppo_forward.1} parent=55 // loop_footer_branch
                %400 = sbr.rel target = $region58
              $region63: #{ppo_forward.1} parent=55 // loop_exit
                _
              %s424 = sshrl.u32 %s385, 2
              %s425 = sand.u32 %s385, 3
              %s426 = smul.u32 %s424, 4
              %s427 = smul.u32 4, %s426
              %s428 = scalar_lea.vmem %s378, %s427 [#allocation2]
              %s429 = smul.u32 4, %s426
              %s430 = scalar_lea.vmem %s389, %s429
              // While loop
              $region64: #{ppo_forward.1} parent=55 // loop_pre_header
                _
              $region65: #{ppo_forward.1} parent=55 // loop_header
                %s432 = sphi 0, %s434
                %p433 = scmp.ge.s32.totalorder %s432, %s425
                %s437 = sphi 0, %s444
                %s438 = sphi %s428, %s447
                %s439 = sphi %s430, %s448
              $region66: #{ppo_forward.1} parent=55 // loop_header_branch
                %436 = sbr.rel (%p433) target = $region70
              $region67: #{ppo_forward.1} parent=55 // loop_body
                %v440 = vld [vmem:[%s438] sm:%s398]
                %441 = vst [vmem:[%s439] sm:%s398] %v440
                %s442 = sadd.s32 1, %s437
                %p443 = scmp.ge.s32.totalorder %s442, %s425
                %s444 = scalar_select %p443, 0, %s442
                %s445 = smul.u32 %s444, 4
                %s446 = smul.u32 %s444, 4
                %s447 = scalar_lea.vmem %s428, %s445 [#allocation2]
                %s448 = scalar_lea.vmem %s430, %s446
              $region68: #{ppo_forward.1} parent=55 // loop_footer
                %s434 = sadd.s32 %s432, 1
              $region69: #{ppo_forward.1} parent=55 // loop_footer_branch
                %431 = sbr.rel target = $region65
              $region70: #{ppo_forward.1} parent=55 // loop_exit
                _
            $region56: #{ppo_forward.1} parent=47 // pred_fallthru
              _
          $region48: #{ppo_forward.1} parent=43 // pred_fallthru
            _
          %503 = vnop
        $region44: #{ppo_forward.1} parent=39 // pred_fallthru
          _
      $region40: #{ppo_forward.1} parent=5 // pred_fallthru
        _
      %p504 = scmp.le.s32.totalorder 2, %s11
      // Predicated region
      $region89: #{ppo_forward.1} parent=5 // pred_check
        %p505 = pneg %p504
      $region90: #{ppo_forward.1} parent=5 // pred_check_branch
        %507 = sbr.rel (%p505) target = $region92
      $region91: #{ppo_forward.1} parent=5 // pred_region
        %s508 = ssub.s32 %s11, 2
        // Predicated region
        $region93: #{ppo_forward.1} parent=91 // pred_check
          %p509 = pneg %p150
        $region94: #{ppo_forward.1} parent=91 // pred_check_branch
          %511 = sbr.rel (%p509) target = $region96
        $region95: #{ppo_forward.1} parent=91 // pred_region
          %s512 = sand.u32 %s135, 1
          %s513 = sand.u32 %s135, 1
          %s514 = smul.addr %s513, 16
          %s515 = scalar_lea.vmem [#allocation2], %s514
        $region96: #{ppo_forward.1} parent=91 // pred_fallthru
          _
      $region92: #{ppo_forward.1} parent=5 // pred_fallthru
        _
    $region6: #{ppo_forward.1} parent=1 // loop_footer
      %s15 = sadd.s32 1, %s11
    $region7: #{ppo_forward.1} parent=1 // loop_footer_branch
      %10 = sbr.rel target = $region3
    $region8: #{ppo_forward.1} parent=1 // loop_exit
      _

</llo_original>
